<compile_context>
chip_gen: v5e
topology: v5e:2x2
jax: 0.10.0
libtpu: 0.0.40
codegen_flags: <defaults>
</compile_context>

<pallas_src>
import functools

import jax
import jax.numpy as jnp
from jax.experimental import pallas as pl
from jax.experimental.pallas import tpu as pltpu


def _layernorm_kernel(x_ref, ab_ref, o_ref, *, eps, f_valid):
    x = x_ref[...].astype(jnp.float32)            # (TR, Fp)
    a = ab_ref[0:1, :].astype(jnp.float32)        # (1, Fp)  scale
    b = ab_ref[1:2, :].astype(jnp.float32)        # (1, Fp)  bias

    f_pad = x.shape[-1]
    if f_valid == f_pad:
        # Lane axis is exactly the feature axis: plain reductions.
        mean = jnp.mean(x, axis=-1, keepdims=True)                     # (TR, 1)
        diff = x - mean
        # Unbiased variance (Bessel) to match torch.Tensor.std default.
        # NOTE: f_valid == 1 divides by zero (torch also returns NaN there).
        var = jnp.sum(diff * diff, axis=-1, keepdims=True) / (f_valid - 1)
    else:
        # Feature axis was zero-padded to a multiple of 128 in the wrapper;
        # mask the padded lanes out of the statistics (static mask).
        lane = jax.lax.broadcasted_iota(jnp.int32, x.shape, dimension=1)
        valid = lane < f_valid
        mean = jnp.sum(jnp.where(valid, x, 0.0), axis=-1, keepdims=True) / f_valid
        diff = x - mean
        var = jnp.sum(jnp.where(valid, diff * diff, 0.0),
                      axis=-1, keepdims=True) / (f_valid - 1)

    # Narrow (TR, 1) reciprocal instead of dividing the whole (TR, Fp) tile.
    inv = pl.reciprocal(jnp.sqrt(var) + eps, approx=False)
    o_ref[...] = (a * diff * inv + b).astype(o_ref.dtype)


def _round_up(v, m):
    return (v + m - 1) // m * m


def layer_norm(x, a_2, b_2, *, eps=1e-6, row_tile=None,
               block_budget_bytes=16 * 1024 * 1024,
               vmem_limit_bytes=32 * 1024 * 1024):
    """LayerNorm over the last axis of x (Annotated-Transformer semantics).

    x:    (..., F)
    a_2:  (F,)  scale
    b_2:  (F,)  bias
    """
    orig_shape = x.shape
    features = orig_shape[-1]
    rows = 1
    for d in orig_shape[:-1]:
        rows *= d

    itemsize = jnp.dtype(x.dtype).itemsize
    packing = max(1, 4 // itemsize)       # rows packed per sublane (1/2/4)
    row_align = 8 * packing               # native sublane tile height

    # --- lane axis: pad features to a multiple of 128 for unmasked stores ---
    f_padded = _round_up(features, 128)
    x2 = x.reshape(rows, features)
    ab = jnp.stack([a_2.reshape(features), b_2.reshape(features)], axis=0)  # (2, F)
    if f_padded != features:
        x2 = jnp.pad(x2, ((0, 0), (0, f_padded - features)))
        ab = jnp.pad(ab, ((0, 0), (0, f_padded - features)))
    ab = ab.astype(x.dtype) if ab.dtype != x.dtype else ab

    # --- sublane axis: auto-size the row tile ---
    if row_tile is None:
        # Per-row VMEM bytes: double-buffered input block + double-buffered
        # output block (4 * Fp * itemsize) plus the in-kernel f32 working set
        # (x.astype(f32) and diff: 2 * Fp * 4).  Budget << vmem_limit leaves
        # headroom for small temporaries / fusion slack.
        per_row_bytes = 4 * f_padded * itemsize + 2 * f_padded * 4
        cap = block_budget_bytes // per_row_bytes
        cap = max(row_align, (cap // row_align) * row_align)
        row_tile = min(cap, 1024)
    row_tile = max(row_align, (int(row_tile) // row_align) * row_align)
    # Never use a tile taller than the (aligned) row count.
    row_tile = min(row_tile, _round_up(rows, row_align))

    # v7x has 2 TensorCores: keep the parallel grid at >= 4 steps when the row
    # count allows, so both cores get work and DMA/compute overlap is primed.
    if pl.cdiv(rows, row_tile) < 4:
        desired = max(row_align, _round_up(pl.cdiv(rows, 4), row_align))
        row_tile = max(row_align, min(row_tile, desired))

    grid = (pl.cdiv(rows, row_tile),)

    out = pl.pallas_call(
        functools.partial(_layernorm_kernel, eps=eps, f_valid=features),
        out_shape=jax.ShapeDtypeStruct((rows, f_padded), x.dtype),
        grid_spec=pltpu.PrefetchScalarGridSpec(
            num_scalar_prefetch=0,
            grid=grid,
            in_specs=[
                pl.BlockSpec((row_tile, f_padded), lambda i: (i, 0)),
                pl.BlockSpec((2, f_padded), lambda i: (0, 0)),
            ],
            out_specs=pl.BlockSpec((row_tile, f_padded), lambda i: (i, 0)),
        ),
        compiler_params=pltpu.CompilerParams(
            dimension_semantics=("parallel",),
            vmem_limit_bytes=vmem_limit_bytes,
        ),
    )(x2, ab)

    if f_padded != features:
        out = out[:, :features]
    return out.reshape(orig_shape)


def _reference(x, a_2, b_2, eps=1e-6):
    x = x.astype(jnp.float32)
    f = x.shape[-1]
    mean = jnp.mean(x, axis=-1, keepdims=True)
    var = jnp.sum((x - mean) ** 2, axis=-1, keepdims=True) / (f - 1)
    return a_2.astype(jnp.float32) * (x - mean) / (jnp.sqrt(var) + eps) \
        + b_2.astype(jnp.float32)


if __name__ == "__main__":
    key = jax.random.PRNGKey(0)
    k1, k2, k3 = jax.random.split(key, 3)

    # Case 1: small Transformer-like shape (batch, seq, hidden); F=32 exercises
    # the lane-padding (F % 128 != 0) path.
    batch, seq, hidden = 2, 8, 32
    x = jax.random.normal(k1, (batch, seq, hidden), dtype=jnp.float32)
    a_2 = jnp.ones((hidden,), dtype=jnp.float32)   # module __init__: ones
    b_2 = jnp.zeros((hidden,), dtype=jnp.float32)  # module __init__: zeros

    out = jax.block_until_ready(layer_norm(x, a_2, b_2))
    ref = _reference(x, a_2, b_2)
    assert jnp.allclose(out, ref, atol=1e-5, rtol=1e-5), "mismatch (case 1)"

    # Case 2: ragged row count + explicit small tile so the last grid block is
    # partial (exercises the masked-write ragged path).
    x2 = jax.random.normal(k2, (2, 9, hidden), dtype=jnp.float32)  # rows = 18
    out2 = jax.block_until_ready(layer_norm(x2, a_2, b_2, row_tile=8))
    ref2 = _reference(x2, a_2, b_2)
    assert jnp.allclose(out2, ref2, atol=1e-5, rtol=1e-5), "mismatch (case 2)"

    # Case 3: bf16 input with F=128 (no lane padding) exercises the
    # dtype-aware row alignment (16) and the >=4-step grid adjustment.
    hidden3 = 128
    x3 = jax.random.normal(k3, (4, 64, hidden3), dtype=jnp.bfloat16)
    a3 = jnp.ones((hidden3,), dtype=jnp.bfloat16)
    b3 = jnp.zeros((hidden3,), dtype=jnp.bfloat16)
    out3 = jax.block_until_ready(layer_norm(x3, a3, b3))
    ref3 = _reference(x3, a3, b3)
    assert jnp.allclose(out3.astype(jnp.float32), ref3, atol=3e-2, rtol=3e-2), \
        "mismatch (case 3, bf16)"

    print("KERNEL_OK")
</pallas_src>

<mosaic_0001>
module attributes {stable_mosaic.version = 11 : i64} {
  func.func @_layernorm_kernel(%arg0: i32, %arg1: memref<8x128xf32, #tpu.memory_space<vmem>>, %arg2: memref<2x128xf32, #tpu.memory_space<vmem>>, %arg3: memref<8x128xf32, #tpu.memory_space<vmem>>) attributes {dimension_semantics = [#tpu.dimension_semantics<parallel>], iteration_bounds = array<i64: 2>, scalar_prefetch = 0 : i64, scratch_operands = 0 : i64, tpu.core_type = #tpu.core_type<tc>, window_params = [{transform_indices = @transform_0, window_bounds = array<i64: 8, 128>}, {pipeline_mode = #tpu.pipeline_mode<synchronous>, transform_indices = @transform_1, window_bounds = array<i64: 2, 128>}, {transform_indices = @transform_2, window_bounds = array<i64: 8, 128>}]} {
    %c0 = arith.constant 0 : index
    %c0_0 = arith.constant 0 : index
    %0 = vector.load %arg1[%c0, %c0_0] : memref<8x128xf32, #tpu.memory_space<vmem>>, vector<8x128xf32>
    %c0_1 = arith.constant 0 : index
    %c0_2 = arith.constant 0 : index
    %1 = vector.load %arg2[%c0_1, %c0_2] : memref<2x128xf32, #tpu.memory_space<vmem>>, vector<1x128xf32>
    %c1 = arith.constant 1 : index
    %c0_3 = arith.constant 0 : index
    %2 = vector.load %arg2[%c1, %c0_3] : memref<2x128xf32, #tpu.memory_space<vmem>>, vector<1x128xf32>
    %3 = tpu.iota {dimensions = array<i32: 1>} : vector<8x128xi32>
    %c32_i32 = arith.constant 32 : i32
    %4 = vector.broadcast %c32_i32 : i32 to vector<8x128xi32>
    %5 = arith.cmpi slt, %3, %4 : vector<8x128xi32>
    %cst = arith.constant 0.000000e+00 : f32
    %6 = vector.broadcast %cst : f32 to vector<8x128xf32>
    %7 = arith.select %5, %0, %6 : vector<8x128xi1>, vector<8x128xf32>
    %cst_4 = arith.constant dense<0.000000e+00> : vector<8xf32>
    %8 = vector.multi_reduction <add>, %7, %cst_4 [1] : vector<8x128xf32> to vector<8xf32>
    %9 = vector.shape_cast %8 : vector<8xf32> to vector<8x1xf32>
    %cst_5 = arith.constant 3.200000e+01 : f32
    %10 = vector.broadcast %cst_5 : f32 to vector<8x1xf32>
    %11 = arith.divf %9, %10 : vector<8x1xf32>
    %12 = vector.broadcast %11 : vector<8x1xf32> to vector<8x128xf32>
    %13 = arith.subf %0, %12 : vector<8x128xf32>
    %14 = arith.mulf %13, %13 : vector<8x128xf32>
    %cst_6 = arith.constant 0.000000e+00 : f32
    %15 = vector.broadcast %cst_6 : f32 to vector<8x128xf32>
    %16 = arith.select %5, %14, %15 : vector<8x128xi1>, vector<8x128xf32>
    %cst_7 = arith.constant dense<0.000000e+00> : vector<8xf32>
    %17 = vector.multi_reduction <add>, %16, %cst_7 [1] : vector<8x128xf32> to vector<8xf32>
    %18 = vector.shape_cast %17 : vector<8xf32> to vector<8x1xf32>
    %cst_8 = arith.constant 3.100000e+01 : f32
    %19 = vector.broadcast %cst_8 : f32 to vector<8x1xf32>
    %20 = arith.divf %18, %19 : vector<8x1xf32>
    %21 = math.sqrt %20 : vector<8x1xf32>
    %cst_9 = arith.constant 9.99999997E-7 : f32
    %22 = vector.broadcast %cst_9 : f32 to vector<8x1xf32>
    %23 = arith.addf %21, %22 : vector<8x1xf32>
    %24 = tpu.reciprocal %23 : vector<8x1xf32> -> vector<8x1xf32>
    %25 = vector.broadcast %1 : vector<1x128xf32> to vector<8x128xf32>
    %26 = arith.mulf %25, %13 : vector<8x128xf32>
    %27 = vector.broadcast %24 : vector<8x1xf32> to vector<8x128xf32>
    %28 = arith.mulf %26, %27 : vector<8x128xf32>
    %29 = vector.broadcast %2 : vector<1x128xf32> to vector<8x128xf32>
    %30 = arith.addf %28, %29 : vector<8x128xf32>
    %c0_10 = arith.constant 0 : index
    %c0_11 = arith.constant 0 : index
    %31 = vector.load %arg3[%c0_10, %c0_11] : memref<8x128xf32, #tpu.memory_space<vmem>>, vector<8x128xf32>
    tpu.vector_store %arg3[%c0_10, %c0_11], %30 {strides = array<i32>} : memref<8x128xf32, #tpu.memory_space<vmem>>, vector<8x128xf32>,
    return
  }
  func.func @transform_0(%arg0: i32) -> (i32, i32) {
    %c0_i32 = arith.constant 0 : i32
    %c0_i32_0 = arith.constant 0 : i32
    return %arg0, %c0_i32 : i32, i32
  }
  func.func @transform_1(%arg0: i32) -> (i32, i32) {
    %c0_i32 = arith.constant 0 : i32
    %c0_i32_0 = arith.constant 0 : i32
    %c0_i32_1 = arith.constant 0 : i32
    return %c0_i32, %c0_i32_0 : i32, i32
  }
  func.func @transform_2(%arg0: i32) -> (i32, i32) {
    %c0_i32 = arith.constant 0 : i32
    %c0_i32_0 = arith.constant 0 : i32
    return %arg0, %c0_i32 : i32, i32
  }
}

</mosaic_0001>

<llo_original>
// kernel: tpu_custom_call.1
$region0: #{tpu_custom_call.1}
  #allocation0 [shape = 'u32[]', space=smem, size = 0x4, offset = 0x4, fixed_abs, tag = 'smem constant byte address 0x4 - core index']
  #allocation1 [shape = 'u32[72,128]{1,0:T(1,128)}', space=vmem, size = 0x9000, scoped, tag = 'internal scratch']
  %s0 = inlined_call_operand.hbm [shape: f32[16,128], index: 0, kind: input, shape index: {}]
  %s1 = inlined_call_operand.hbm [shape: f32[2,128], index: 1, kind: input, shape index: {}]
  %s2 = inlined_call_operand.hbm [shape: f32[16,128], index: 2, kind: output, shape index: {}]
  %s3 = sld [smem:[#allocation0]]
  $region49: #{tpu_custom_call.1} parent=0
    _
  %s5 = ssub.s32 1, %s3
  %s6 = scalar_select 0, %s5, %s3
  $region1: #{tpu_custom_call.1} parent=0
    #allocation2 [shape = 'u8[8192]{0}', space=vmem, size = 0x2000, scoped, tag = 'input window, operand 0']
    #allocation3 [shape = 's32[2]{0}', space=sflag, size = 0x8, scoped, tag = 'scoped memory for tpu_custom_call.1']
    #allocation4 [shape = 's32[2]{0}', space=sflag, size = 0x8, scoped, tag = 'scoped memory for tpu_custom_call.1']
    #allocation5 [shape = 'u8[1024]{0}', space=vmem, size = 0x400, scoped, tag = 'input window, operand 1, single buffered']
    #allocation6 [shape = 's32[1]{0}', space=sflag, size = 0x4, scoped, tag = 'scoped memory for tpu_custom_call.1']
    #allocation7 [shape = 'u8[8192]{0}', space=vmem, size = 0x2000, scoped, tag = 'output window, operand 0']
    %7 = vsyncpa [#allocation3], 0
    %s8 = scalar_lea.sflag [#allocation3], 1
    %9 = vsyncpa %s8, 0
    %10 = vsyncpa [#allocation6], 0
    %11 = vsyncpa [#allocation4], 0
    %s12 = scalar_lea.sflag [#allocation4], 1
    %13 = vsyncpa %s12, 0
    loop: start=0, step=1, limit=4
    $region2: #{tpu_custom_call.1} parent=1 // loop_pre_header
      _
    $region3: #{tpu_custom_call.1} parent=1 // loop_header
      %s15 = sphi 0, %s19
      %p16 = scmp.ge.s32.totalorder %s15, 4
      %s25 = sphi 0, %s27
      %s28 = sphi 0, %s25
      %s29 = sphi 0, %s28
      %s45 = sphi 0, %s29
      %s49 = sphi 0, %s49
      %s51 = sphi 0, %s49
      %s52 = sphi 0, %s51
      %s66 = sphi 0, %s52
      %s72 = sphi 0, %s74
      %s75 = sphi 0, %s72
      %s76 = sphi 0, %s75
      %s92 = sphi 0, %s76
    $region4: #{tpu_custom_call.1} parent=1 // loop_header_branch
      %18 = sbr.rel (%p16) target = $region8
    $region5: #{tpu_custom_call.1} parent=1 // loop_body
      %s20 = ssub.s32 %s15, 1
      %s21 = ssub.s32 %s15, 2
      %s22 = sadd.s32 %s15, 1
      %s23 = ssub.s32 %s15, %s22
      %p24 = scmp.eq.s32.totalorder %s23, 0
      %s26 = sadd.s32 %s25, 1
      %s27 = scalar_select %p24, %s25, %s26
      %p30 = pneg %p24
      %p31 = scmp.eq.s32.totalorder %s15, 1
      %p32 = por %p30, %p31
      %p33 = scmp.ne.s32.totalorder %s25, %s28
      %p34 = scmp.eq.s32.totalorder %s15, 0
      %p35 = por %p33, %p34
      %p36 = scmp.ne.s32.totalorder %s25, %s28
      %p37 = scmp.eq.s32.totalorder %s20, 1
      %p38 = por %p36, %p37
      %p39 = scmp.ne.s32.totalorder %s28, %s29
      %p40 = scmp.eq.s32.totalorder %s20, 0
      %p41 = por %p39, %p40
      %p42 = scmp.ne.s32.totalorder %s28, %s29
      %p43 = scmp.eq.s32.totalorder %s21, 1
      %p44 = por %p42, %p43
      %p46 = scmp.ne.s32.totalorder %s29, %s45
      %p47 = scmp.eq.s32.totalorder %s21, 0
      %p48 = por %p46, %p47
      %s50 = sadd.s32 %s49, 1
      %p53 = scmp.eq.s32.totalorder %s15, 1
      %p54 = scmp.ne.s32.totalorder %s49, %s51
      %p55 = scmp.eq.s32.totalorder %s15, 0
      %p56 = por %p54, %p55
      %p57 = scmp.ne.s32.totalorder %s49, %s51
      %p58 = scmp.eq.s32.totalorder %s20, 1
      %p59 = por %p57, %p58
      %p60 = scmp.ne.s32.totalorder %s51, %s52
      %p61 = scmp.eq.s32.totalorder %s20, 0
      %p62 = por %p60, %p61
      %p63 = scmp.ne.s32.totalorder %s51, %s52
      %p64 = scmp.eq.s32.totalorder %s21, 1
      %p65 = por %p63, %p64
      %p67 = scmp.ne.s32.totalorder %s52, %s66
      %p68 = scmp.eq.s32.totalorder %s21, 0
      %p69 = por %p67, %p68
      %s70 = ssub.s32 %s15, %s22
      %p71 = scmp.eq.s32.totalorder %s70, 0
      %s73 = sadd.s32 %s72, 1
      %s74 = scalar_select %p71, %s72, %s73
      %p77 = pneg %p71
      %p78 = scmp.eq.s32.totalorder %s15, 1
      %p79 = por %p77, %p78
      %p80 = scmp.ne.s32.totalorder %s72, %s75
      %p81 = scmp.eq.s32.totalorder %s15, 0
      %p82 = por %p80, %p81
      %p83 = scmp.ne.s32.totalorder %s72, %s75
      %p84 = scmp.eq.s32.totalorder %s20, 1
      %p85 = por %p83, %p84
      %p86 = scmp.ne.s32.totalorder %s75, %s76
      %p87 = scmp.eq.s32.totalorder %s20, 0
      %p88 = por %p86, %p87
      %p89 = scmp.ne.s32.totalorder %s75, %s76
      %p90 = scmp.eq.s32.totalorder %s21, 1
      %p91 = por %p89, %p90
      %p93 = scmp.ne.s32.totalorder %s76, %s92
      %p94 = scmp.eq.s32.totalorder %s21, 0
      %p95 = por %p93, %p94
      %p96 = scmp.le.s32.totalorder 1, %s15
      %p97 = scmp.lt.s32.totalorder %s15, 3
      %p98 = pnand %p96, %p97
      %p99 = pneg %p98
      // Predicated region
      $region9: #{tpu_custom_call.1} parent=5 // pred_check
        _
      $region10: #{tpu_custom_call.1} parent=5 // pred_check_branch
        %101 = sbr.rel (%p98) target = $region12
      $region11: #{tpu_custom_call.1} parent=5 // pred_region
        %s102 = ssub.s32 %s15, 1
        // Predicated region
        $region13: #{tpu_custom_call.1} parent=11 // pred_check
          %p103 = pneg %p62
        $region14: #{tpu_custom_call.1} parent=11 // pred_check_branch
          %105 = sbr.rel (%p103) target = $region16
        $region15: #{tpu_custom_call.1} parent=11 // pred_region
          %107 = vsyncadd [#allocation6], 0
          %s109 = sshll.u32 %s1, 4
          %s110 = int_to_ptr.hbm [resolvable:$true] %s109
          %s111 = sshll.u32 [#allocation5], 4
          %s112 = int_to_ptr.vmem [resolvable:$true] %s111
          %114 = dma.hbm_to_vmem [thread:$0]  %s110, 32, %s112, [#allocation6]
        $region16: #{tpu_custom_call.1} parent=11 // pred_fallthru
          _
      $region12: #{tpu_custom_call.1} parent=5 // pred_fallthru
        _
      %p115 = scmp.lt.s32.totalorder %s15, 2
      // Predicated region
      $region17: #{tpu_custom_call.1} parent=5 // pred_check
        %p116 = pneg %p115
      $region18: #{tpu_custom_call.1} parent=5 // pred_check_branch
        %118 = sbr.rel (%p116) target = $region20
      $region19: #{tpu_custom_call.1} parent=5 // pred_region
        // Predicated region
        $region21: #{tpu_custom_call.1} parent=19 // pred_check
          %p119 = pneg %p35
        $region22: #{tpu_custom_call.1} parent=19 // pred_check_branch
          %121 = sbr.rel (%p119) target = $region24
        $region23: #{tpu_custom_call.1} parent=19 // pred_region
          %s122 = sand.u32 %s25, 1
          %s123 = scalar_lea.sflag [#allocation3], %s122
          %s124 = sand.u32 %s25, 1
          %s125 = smul.addr %s124, 8
          %s126 = scalar_lea.vmem [#allocation2], %s125
          %128 = vsyncadd %s123, 0
          %s129 = smul.addr %s15, 8
          %s130 = scalar_lea.hbm %s0, %s129
          %s132 = sshll.u32 %s130, 4
          %s133 = int_to_ptr.hbm [resolvable:$true] %s132
          %s134 = sshll.u32 %s126, 4
          %s135 = int_to_ptr.vmem [resolvable:$true] %s134
          %137 = dma.hbm_to_vmem [thread:$0]  %s133, 128, %s135, %s123
        $region24: #{tpu_custom_call.1} parent=19 // pred_fallthru
          _
      $region20: #{tpu_custom_call.1} parent=5 // pred_fallthru
        _
      %p138 = scmp.le.s32.totalorder 1, %s15
      %p139 = scmp.lt.s32.totalorder %s15, 3
      %p140 = pnand %p138, %p139
      %p141 = pneg %p140
      // Predicated region
      $region25: #{tpu_custom_call.1} parent=5 // pred_check
        _
      $region26: #{tpu_custom_call.1} parent=5 // pred_check_branch
        %143 = sbr.rel (%p140) target = $region28
      $region27: #{tpu_custom_call.1} parent=5 // pred_region
        %s144 = ssub.s32 %s15, 1
        %s145 = sand.u32 %s28, 1
        %s146 = scalar_lea.sflag [#allocation3], %s145
        %s147 = sand.u32 %s28, 1
        %s148 = smul.addr %s147, 8
        %s149 = scalar_lea.vmem [#allocation2], %s148
        // Predicated region
        $region29: #{tpu_custom_call.1} parent=27 // pred_check
          %p150 = pneg %p41
        $region30: #{tpu_custom_call.1} parent=27 // pred_check_branch
          %152 = sbr.rel (%p150) target = $region32
        $region31: #{tpu_custom_call.1} parent=27 // pred_region
          %154 = dma.done %s146, 128
        $region32: #{tpu_custom_call.1} parent=27 // pred_fallthru
          _
        // Predicated region
        $region33: #{tpu_custom_call.1} parent=27 // pred_check
          %p155 = pneg %p62
        $region34: #{tpu_custom_call.1} parent=27 // pred_check_branch
          %157 = sbr.rel (%p155) target = $region36
        $region35: #{tpu_custom_call.1} parent=27 // pred_region
          %159 = dma.done [#allocation6], 32
        $region36: #{tpu_custom_call.1} parent=27 // pred_fallthru
          _
        %s160 = sand.u32 %s28, 1
        %s161 = scalar_lea.sflag [#allocation3], %s160
        %s162 = sand.u32 %s28, 1
        %s163 = smul.addr %s162, 8
        %s164 = scalar_lea.vmem [#allocation2], %s163
        %p165 = pneg %p41
        %p166 = pneg %p38
        %p167 = pneg %p62
        %p168 = pneg %p59
        %p169 = pneg %p88
        %p170 = pneg %p85
        %s171 = sand.u32 %s75, 1
        %s172 = scalar_lea.sflag [#allocation4], %s171
        %s173 = sand.u32 %s75, 1
        %s174 = smul.addr %s173, 8
        %s175 = scalar_lea.vmem [#allocation7], %s174
        %v176 = vld [vmem:[%s149] sm:$0xff]
        %v177 = vld [vmem:[#allocation5] sm:$0x1]
        %v178 = vld [vmem:[#allocation5 + $0x1] sm:$0x1]
        %v179 = vlaneseq
        %v180 = vand.u32 %v179, 127
        %vm181 = vcmp.lt.s32.totalorder %v180, 32
        %v182 = vsel %vm181, %v176, 0.0
        %183 = vadd.xlane.f32.xlu0 %v182
        %v184 = vpop.xlane.xlu0 %183
        %v185 = vrcp.pop 32.0
        %v186 = vmul.f32 32.0, %v185
        %v187 = vsub.f32 1.0, %v186
        %v188 = vmul.f32 %v185, %v187
        %v189 = vadd.f32 %v185, %v188
        %vm190 = vweird.f32 %v185
        %v191 = vsel %vm190, %v185, %v189
        %v192 = vmul.f32 %v184, %v191
        %v193 = vsub.f32 %v176, %v192
        %v194 = vmul.f32 %v193, %v193
        %v195 = vsel %vm181, %v194, 0.0
        %196 = vadd.xlane.f32.xlu0 %v195
        %v197 = vpop.xlane.xlu0 %196
        %v198 = vrcp.pop 31.0
        %v199 = vmul.f32 31.0, %v198
        %v200 = vsub.f32 1.0, %v199
        %v201 = vmul.f32 %v198, %v200
        %v202 = vadd.f32 %v198, %v201
        %vm203 = vweird.f32 %v198
        %v204 = vsel %vm203, %v198, %v202
        %v205 = vmul.f32 %v197, %v204
        %v206 = vrsqrt.pop %v205
        %v207 = vmul.f32 %v206, %v205
        %v208 = vmul.f32 %v207, %v206
        %v209 = vmul.f32 0.5, %v208
        %v210 = vsub.f32 1.5, %v209
        %v211 = vmul.f32 %v206, %v210
        %v212 = vmul.f32 %v205, %v211
        %vm213 = vcmp.eq.f32.partialorder %v205, inf
        %v214 = vsel %vm213, %v205, %v212
        %vm215 = vcmp.eq.f32.partialorder %v205, 0.0
        %v216 = vand.u32 %v205, 2147483648
        %v217 = vsel %vm215, %v216, %v214
        %v218 = vadd.f32 %v217, 1e-06
        %v219 = vrcp.pop %v218
        %v220 = vmul.f32 %v218, %v219
        %v221 = vsub.f32 1.0, %v220
        %v222 = vmul.f32 %v219, %v221
        %v223 = vadd.f32 %v219, %v222
        %vm224 = vweird.f32 %v218
        %vm225 = vweird.f32 %v219
        %vm226 = vmor %vm224, %vm225
        %v227 = vsel %vm226, %v219, %v223
        %v228 = vand.u32 2147483647, %v218
        %vm229 = vcmp.eq.f32.partialorder %v228, 8.507059e+37
        %v230 = vand.u32 %v218, 2147483648
        %v231 = vor.u32 1.1754944e-38, %v230
        %v232 = vsel %vm229, %v231, %v227
        %v233 = vperm.slane %v177, 0
        %v234 = vmul.f32 %v233, %v193
        %v235 = vmul.f32 %v234, %v232
        %v236 = vperm.slane %v178, 0
        %v237 = vadd.f32 %v235, %v236
        %238 = vst [vmem:[%s175] sm:$0xff] %v237
        %s239 = sand.u32 %s75, 1
        %s240 = scalar_lea.sflag [#allocation4], %s239
        %s241 = sand.u32 %s75, 1
        %s242 = smul.addr %s241, 8
        %s243 = scalar_lea.vmem [#allocation7], %s242
        // Predicated region
        $region37: #{tpu_custom_call.1} parent=27 // pred_check
          %p244 = pneg %p85
        $region38: #{tpu_custom_call.1} parent=27 // pred_check_branch
          %246 = sbr.rel (%p244) target = $region40
        $region39: #{tpu_custom_call.1} parent=27 // pred_region
          %248 = vsyncadd %s240, 0
          %s249 = smul.addr %s20, 8
          %s250 = scalar_lea.hbm %s2, %s249
          %s252 = sshll.u32 %s243, 4
          %s253 = int_to_ptr.vmem [resolvable:$true] %s252
          %s254 = sshll.u32 %s250, 4
          %s255 = int_to_ptr.hbm [resolvable:$true] %s254
          %257 = dma.vmem_to_hbm [thread:$0]  %s253, 128, %s255, %s240
        $region40: #{tpu_custom_call.1} parent=27 // pred_fallthru
          _
      $region28: #{tpu_custom_call.1} parent=5 // pred_fallthru
        _
      %p258 = scmp.le.s32.totalorder 2, %s15
      // Predicated region
      $region41: #{tpu_custom_call.1} parent=5 // pred_check
        %p259 = pneg %p258
      $region42: #{tpu_custom_call.1} parent=5 // pred_check_branch
        %261 = sbr.rel (%p259) target = $region44
      $region43: #{tpu_custom_call.1} parent=5 // pred_region
        %s262 = ssub.s32 %s15, 2
        // Predicated region
        $region45: #{tpu_custom_call.1} parent=43 // pred_check
          %p263 = pneg %p91
        $region46: #{tpu_custom_call.1} parent=43 // pred_check_branch
          %265 = sbr.rel (%p263) target = $region48
        $region47: #{tpu_custom_call.1} parent=43 // pred_region
          %s266 = sand.u32 %s76, 1
          %s267 = scalar_lea.sflag [#allocation4], %s266
          %s268 = sand.u32 %s76, 1
          %s269 = smul.addr %s268, 8
          %s270 = scalar_lea.vmem [#allocation7], %s269
          %272 = dma.done %s267, 128
        $region48: #{tpu_custom_call.1} parent=43 // pred_fallthru
          _
      $region44: #{tpu_custom_call.1} parent=5 // pred_fallthru
        _
    $region6: #{tpu_custom_call.1} parent=1 // loop_footer
      %s19 = sadd.s32 1, %s15
    $region7: #{tpu_custom_call.1} parent=1 // loop_footer_branch
      %14 = sbr.rel target = $region3
    $region8: #{tpu_custom_call.1} parent=1 // loop_exit
      _
    %273 = vsyncpa [#allocation3], 1
    %s274 = scalar_lea.sflag [#allocation3], 1
    %275 = vsyncpa %s274, 1
    %276 = vsyncpa [#allocation6], 1
    %277 = vsyncpa [#allocation4], 1
    %s278 = scalar_lea.sflag [#allocation4], 1
    %279 = vsyncpa %s278, 1

</llo_original>
